<compile_context>
chip_gen: v7x
topology: tpu7x:2x2x1
jax: 0.10.0
libtpu: 0.0.40
codegen_flags: <defaults>
</compile_context>

<pallas_src>
import jax
import jax.numpy as jnp
from jax import lax
from jax.experimental import pallas as pl
from jax.experimental.pallas import tpu as pltpu


# Contract lhs dim-1 with rhs dim-1 ("NT" matmul): (size, D_in) x (bt, D_in) -> (size, bt)
_NT_DIMS = (((1,), (1,)), ((), ()))


def mlp_kernel(x_ref, w1_ref, b1_ref, w2_ref, b2_ref, w3_ref, b3_ref, o_ref):
    # x_ref:  (bt, D_in)    bf16, native (batch, feature) layout
    # w1_ref: (size, D_in)  bf16, PyTorch layout (out_features, in_features)
    # w2_ref: (size, size)  bf16
    # b1_ref, b2_ref, w3_ref: (size, 1) f32 columns (broadcast over lanes)
    # b3_ref: (1, 1) f32 scalar in SMEM
    # o_ref:  (1, bt)       lane-dense output row for this batch tile
    h1 = lax.dot_general(w1_ref[...], x_ref[...], _NT_DIMS,
                         preferred_element_type=jnp.float32)            # (size, bt) f32
    h1 = jnp.maximum(h1 + b1_ref[...], 0.0)                             # bias+ReLU in f32
    h2 = jnp.dot(w2_ref[...], h1.astype(jnp.bfloat16),
                 preferred_element_type=jnp.float32)                    # (size, bt) f32
    h2 = jnp.maximum(h2 + b2_ref[...], 0.0)
    # Final 128 -> 1 projection: VPU multiply + sublane (XLU) reduction, keeps MXU free
    # and the output store lane-dense.
    out = jnp.sum(h2 * w3_ref[...], axis=0, keepdims=True) + b3_ref[0, 0]   # (1, bt)
    o_ref[...] = out.astype(o_ref.dtype)


def _ceil_to(n, m):
    return -(-n // m) * m


def mlp_forward(x, w1, b1, w2, b2, w3, b3, *, batch_tile=None):
    """Fused MLP forward.  Weights are in PyTorch nn.Linear layout:
       w: (out_features, in_features), b: (out_features,)."""
    B, D_in = x.shape
    size = w1.shape[0]
    assert w1.shape == (size, D_in)
    assert b1.shape == (size,)
    assert w2.shape == (size, size)
    assert b2.shape == (size,)
    assert w3.shape == (1, size)
    assert b3.shape == (1,)

    if batch_tile is None:
        b256 = _ceil_to(B, 256)          # 256-multiples: lane-dense on 256-wide MXU arrays
        if b256 <= 512:
            batch_tile = b256            # tiny batch: one full tile
        elif b256 <= 4096:
            batch_tile = _ceil_to(b256 // 2, 256)   # >=2 grid steps -> v7x dual-TC coverage
        else:
            batch_tile = 2048            # big batch: amortize ~0.35us/step pipeline overhead
    assert batch_tile % 256 == 0, "batch_tile must be a multiple of 256"

    num_tiles = _ceil_to(B, batch_tile) // batch_tile
    B_pad = num_tiles * batch_tile
    out_dtype = x.dtype

    # Pad + cast fuse into one cheap elementwise XLA pass (no host transpose of x).
    # bf16 operands: ~2-4x MXU rate vs f32 and half the per-step x DMA.  f32 accumulation
    # is preserved inside the kernel via preferred_element_type.
    x_pad = x if B_pad == B else jnp.pad(x, ((0, B_pad - B), (0, 0)))
    xb = x_pad.astype(jnp.bfloat16)
    w1b = w1.astype(jnp.bfloat16)
    w2b = w2.astype(jnp.bfloat16)

    b1c = b1.reshape(size, 1).astype(jnp.float32)
    b2c = b2.reshape(size, 1).astype(jnp.float32)
    w3c = w3.reshape(size, 1).astype(jnp.float32)   # column of the 1-output head (f32 VPU)
    b3s = b3.reshape(1, 1).astype(jnp.float32)      # scalar -> SMEM

    flops = 2 * B_pad * (D_in * size + size * size + size) + 3 * B_pad * size
    bytes_accessed = (2 * (xb.size + w1b.size + w2b.size)
                      + 4 * (b1c.size + b2c.size + w3c.size + b3s.size)
                      + jnp.dtype(out_dtype).itemsize * B_pad)

    out = pl.pallas_call(
        mlp_kernel,
        out_shape=jax.ShapeDtypeStruct((num_tiles, 1, batch_tile), out_dtype),
        grid_spec=pltpu.PrefetchScalarGridSpec(
            num_scalar_prefetch=0,
            grid=(num_tiles,),
            in_specs=[
                pl.BlockSpec((batch_tile, D_in), lambda i: (i, 0)),   # x tile, native layout
                # Constant index_maps -> weights stay VMEM-resident across grid steps.
                pl.BlockSpec((size, D_in), lambda i: (0, 0)),         # w1
                pl.BlockSpec((size, 1), lambda i: (0, 0)),            # b1 column
                pl.BlockSpec((size, size), lambda i: (0, 0)),         # w2
                pl.BlockSpec((size, 1), lambda i: (0, 0)),            # b2 column
                pl.BlockSpec((size, 1), lambda i: (0, 0)),            # w3 column
                pl.BlockSpec(memory_space=pltpu.MemorySpace.SMEM),    # b3 scalar
            ],
            out_specs=pl.BlockSpec((None, 1, batch_tile), lambda i: (i, 0, 0)),
        ),
        compiler_params=pltpu.CompilerParams(
            # TODO(synk): on v7x confirm "parallel" shards the batch grid across both
            # TensorCores; if not, switch this axis to pltpu.CORE_PARALLEL / core_map.
            dimension_semantics=("parallel",)),
        cost_estimate=pl.CostEstimate(
            flops=int(flops), transcendentals=0, bytes_accessed=int(bytes_accessed)),
    )(xb, w1b, b1c, w2b, b2c, w3c, b3s)

    # (num_tiles, 1, batch_tile) flattens in batch order; drop padding rows.
    return out.reshape(B_pad, 1)[:B]


def _init_linear(key, fan_in, fan_out):
    # Deterministic init mimicking torch.nn.Linear default (uniform +/- 1/sqrt(fan_in)),
    # stored in PyTorch layout: w (fan_out, fan_in), b (fan_out,).
    kw, kb = jax.random.split(key)
    bound = 1.0 / jnp.sqrt(jnp.float32(fan_in))
    w = jax.random.uniform(kw, (fan_out, fan_in), jnp.float32, -bound, bound)
    b = jax.random.uniform(kb, (fan_out,), jnp.float32, -bound, bound)
    return w, b


def reference_mlp(x, w1, b1, w2, b2, w3, b3):
    h = jnp.maximum(x @ w1.T + b1, 0.0)
    h = jnp.maximum(h @ w2.T + b2, 0.0)
    return h @ w3.T + b3


if __name__ == "__main__":
    key = jax.random.PRNGKey(0)
    k_x, k1, k2, k3 = jax.random.split(key, 4)

    B = 8            # batch of input rows
    D_in = 32        # input_dimensions
    SIZE = 128       # hidden size (matches module default)

    x = jax.random.normal(k_x, (B, D_in), jnp.float32)
    w1, b1 = _init_linear(k1, D_in, SIZE)     # (SIZE, D_in), (SIZE,)
    w2, b2 = _init_linear(k2, SIZE, SIZE)     # (SIZE, SIZE), (SIZE,)
    w3, b3 = _init_linear(k3, SIZE, 1)        # (1, SIZE),   (1,)

    out = jax.block_until_ready(mlp_forward(x, w1, b1, w2, b2, w3, b3))
    ref = reference_mlp(x, w1, b1, w2, b2, w3, b3)
    assert out.shape == (B, 1)
    # bf16 matmul operands (f32 accumulation) -> relaxed tolerance vs the f32 reference.
    assert jnp.allclose(out, ref, atol=5e-2, rtol=5e-2), "Pallas output mismatch vs reference"

    # Exercise the tiled/pipelined path: grid > 1 and a ragged batch (600 -> pad to 768).
    B2 = 600
    x2 = jax.random.normal(jax.random.PRNGKey(1), (B2, D_in), jnp.float32)
    out2 = jax.block_until_ready(
        mlp_forward(x2, w1, b1, w2, b2, w3, b3, batch_tile=256))
    ref2 = reference_mlp(x2, w1, b1, w2, b2, w3, b3)
    assert out2.shape == (B2, 1)
    assert jnp.allclose(out2, ref2, atol=5e-2, rtol=5e-2), "Tiled-path mismatch vs reference"

    print("KERNEL_OK")
</pallas_src>

<mosaic_0001>
module attributes {stable_mosaic.version = 11 : i64} {
  func.func @mlp_kernel(%arg0: i32, %arg1: memref<256x32xbf16, #tpu.memory_space<vmem>>, %arg2: memref<128x32xbf16, #tpu.memory_space<vmem>>, %arg3: memref<128x1xf32, #tpu.memory_space<vmem>>, %arg4: memref<128x128xbf16, #tpu.memory_space<vmem>>, %arg5: memref<128x1xf32, #tpu.memory_space<vmem>>, %arg6: memref<128x1xf32, #tpu.memory_space<vmem>>, %arg7: memref<1x1xf32, #tpu.memory_space<smem>>, %arg8: memref<1x1x256xf32, #tpu.memory_space<vmem>>) attributes {dimension_semantics = [#tpu.dimension_semantics<parallel>], iteration_bounds = array<i64: 1>, scalar_prefetch = 0 : i64, scratch_operands = 0 : i64, tpu.core_type = #tpu.core_type<tc>, window_params = [{transform_indices = @transform_0, window_bounds = array<i64: 256, 32>}, {pipeline_mode = #tpu.pipeline_mode<synchronous>, transform_indices = @transform_1, window_bounds = array<i64: 128, 32>}, {pipeline_mode = #tpu.pipeline_mode<synchronous>, transform_indices = @transform_2, window_bounds = array<i64: 128, 1>}, {pipeline_mode = #tpu.pipeline_mode<synchronous>, transform_indices = @transform_3, window_bounds = array<i64: 128, 128>}, {pipeline_mode = #tpu.pipeline_mode<synchronous>, transform_indices = @transform_4, window_bounds = array<i64: 128, 1>}, {pipeline_mode = #tpu.pipeline_mode<synchronous>, transform_indices = @transform_5, window_bounds = array<i64: 128, 1>}, {transform_indices = @transform_6, window_bounds = array<i64: 1, 1>}, {transform_indices = @transform_7, window_bounds = array<i64: 1, 1, 256>}]} {
    %c0 = arith.constant 0 : index
    %c0_0 = arith.constant 0 : index
    %0 = vector.load %arg2[%c0, %c0_0] : memref<128x32xbf16, #tpu.memory_space<vmem>>, vector<128x32xbf16>
    %c0_1 = arith.constant 0 : index
    %c0_2 = arith.constant 0 : index
    %1 = vector.load %arg1[%c0_1, %c0_2] : memref<256x32xbf16, #tpu.memory_space<vmem>>, vector<256x32xbf16>
    %cst = arith.constant dense<0.000000e+00> : vector<128x256xf32>
    %2 = tpu.matmul %0, %1, %cst {dimension_numbers = #tpu.dot_dimension_numbers<[1], [1], [0], [0], [0, 0, 1, 0], [], []>} : vector<128x32xbf16>, vector<256x32xbf16>, vector<128x256xf32> -> vector<128x256xf32>
    %c0_3 = arith.constant 0 : index
    %c0_4 = arith.constant 0 : index
    %3 = vector.load %arg3[%c0_3, %c0_4] : memref<128x1xf32, #tpu.memory_space<vmem>>, vector<128x1xf32>
    %4 = vector.broadcast %3 : vector<128x1xf32> to vector<128x256xf32>
    %5 = arith.addf %2, %4 : vector<128x256xf32>
    %cst_5 = arith.constant 0.000000e+00 : f32
    %6 = vector.broadcast %cst_5 : f32 to vector<128x256xf32>
    %7 = arith.maximumf %5, %6 : vector<128x256xf32>
    %c0_6 = arith.constant 0 : index
    %c0_7 = arith.constant 0 : index
    %8 = vector.load %arg4[%c0_6, %c0_7] : memref<128x128xbf16, #tpu.memory_space<vmem>>, vector<128x128xbf16>
    %9 = arith.truncf %7 : vector<128x256xf32> to vector<128x256xbf16>
    %cst_8 = arith.constant dense<0.000000e+00> : vector<128x256xf32>
    %10 = tpu.matmul %8, %9, %cst_8 {dimension_numbers = #tpu.dot_dimension_numbers<[1], [0], [0], [1], [0, 0, 1, 1], [], []>} : vector<128x128xbf16>, vector<128x256xbf16>, vector<128x256xf32> -> vector<128x256xf32>
    %c0_9 = arith.constant 0 : index
    %c0_10 = arith.constant 0 : index
    %11 = vector.load %arg5[%c0_9, %c0_10] : memref<128x1xf32, #tpu.memory_space<vmem>>, vector<128x1xf32>
    %12 = vector.broadcast %11 : vector<128x1xf32> to vector<128x256xf32>
    %13 = arith.addf %10, %12 : vector<128x256xf32>
    %cst_11 = arith.constant 0.000000e+00 : f32
    %14 = vector.broadcast %cst_11 : f32 to vector<128x256xf32>
    %15 = arith.maximumf %13, %14 : vector<128x256xf32>
    %c0_12 = arith.constant 0 : index
    %c0_13 = arith.constant 0 : index
    %16 = vector.load %arg6[%c0_12, %c0_13] : memref<128x1xf32, #tpu.memory_space<vmem>>, vector<128x1xf32>
    %17 = vector.broadcast %16 : vector<128x1xf32> to vector<128x256xf32>
    %18 = arith.mulf %15, %17 : vector<128x256xf32>
    %cst_14 = arith.constant dense<0.000000e+00> : vector<256xf32>
    %19 = vector.multi_reduction <add>, %18, %cst_14 [0] : vector<128x256xf32> to vector<256xf32>
    %20 = vector.shape_cast %19 : vector<256xf32> to vector<1x256xf32>
    %c0_15 = arith.constant 0 : index
    %c0_16 = arith.constant 0 : index
    %21 = memref.load %arg7[%c0_15, %c0_16] : memref<1x1xf32, #tpu.memory_space<smem>>
    %22 = vector.broadcast %21 : f32 to vector<1x256xf32>
    %23 = arith.addf %20, %22 : vector<1x256xf32>
    %c0_17 = arith.constant 0 : index
    %c0_18 = arith.constant 0 : index
    %c0_19 = arith.constant 0 : index
    %24 = vector.load %arg8[%c0_17, %c0_18, %c0_19] : memref<1x1x256xf32, #tpu.memory_space<vmem>>, vector<1x1x256xf32>
    %25 = vector.shape_cast %24 : vector<1x1x256xf32> to vector<1x256xf32>
    %26 = vector.shape_cast %23 : vector<1x256xf32> to vector<1x1x256xf32>
    tpu.vector_store %arg8[%c0_17, %c0_18, %c0_19], %26 {strides = array<i32>} : memref<1x1x256xf32, #tpu.memory_space<vmem>>, vector<1x1x256xf32>,
    return
  }
  func.func @transform_0(%arg0: i32) -> (i32, i32) {
    %c0_i32 = arith.constant 0 : i32
    %c0_i32_0 = arith.constant 0 : i32
    return %arg0, %c0_i32 : i32, i32
  }
  func.func @transform_1(%arg0: i32) -> (i32, i32) {
    %c0_i32 = arith.constant 0 : i32
    %c0_i32_0 = arith.constant 0 : i32
    %c0_i32_1 = arith.constant 0 : i32
    return %c0_i32, %c0_i32_0 : i32, i32
  }
  func.func @transform_2(%arg0: i32) -> (i32, i32) {
    %c0_i32 = arith.constant 0 : i32
    %c0_i32_0 = arith.constant 0 : i32
    %c0_i32_1 = arith.constant 0 : i32
    return %c0_i32, %c0_i32_0 : i32, i32
  }
  func.func @transform_3(%arg0: i32) -> (i32, i32) {
    %c0_i32 = arith.constant 0 : i32
    %c0_i32_0 = arith.constant 0 : i32
    %c0_i32_1 = arith.constant 0 : i32
    return %c0_i32, %c0_i32_0 : i32, i32
  }
  func.func @transform_4(%arg0: i32) -> (i32, i32) {
    %c0_i32 = arith.constant 0 : i32
    %c0_i32_0 = arith.constant 0 : i32
    %c0_i32_1 = arith.constant 0 : i32
    return %c0_i32, %c0_i32_0 : i32, i32
  }
  func.func @transform_5(%arg0: i32) -> (i32, i32) {
    %c0_i32 = arith.constant 0 : i32
    %c0_i32_0 = arith.constant 0 : i32
    %c0_i32_1 = arith.constant 0 : i32
    return %c0_i32, %c0_i32_0 : i32, i32
  }
  func.func @transform_6(%arg0: i32) -> (i32, i32) {
    %c0_i32 = arith.constant 0 : i32
    %c0_i32_0 = arith.constant 0 : i32
    %c0_i32_1 = arith.constant 0 : i32
    return %c0_i32, %c0_i32_0 : i32, i32
  }
  func.func @transform_7(%arg0: i32) -> (i32, i32, i32) {
    %c0_i32 = arith.constant 0 : i32
    %c0_i32_0 = arith.constant 0 : i32
    %c0_i32_1 = arith.constant 0 : i32
    return %arg0, %c0_i32, %c0_i32_0 : i32, i32, i32
  }
}

</mosaic_0001>

<llo_original>
// kernel: tpu_custom_call.1
$region0: #{tpu_custom_call.1}
  #allocation0 [shape = 'u32[]', space=smem, size = 0x4, offset = 0x4, fixed_abs, tag = 'smem constant byte address 0x4 - core index']
  #allocation1 [shape = 'u32[144,128]{1,0:T(1,128)}', space=vmem, size = 0x12000, scoped, tag = 'internal scratch']
  #allocation2 [shape = 'f32[1,1]{1,0:T(1,128)S(6)}', space=smem, size = 0x200, scoped, tag = 'scoped memory for tpu_custom_call.1']
  %s0 = inlined_call_operand.vmem [shape: bf16[256,32], index: 0, kind: input, shape index: {}]
  %s1 = inlined_call_operand.vmem [shape: bf16[128,32], index: 1, kind: input, shape index: {}]
  %s2 = inlined_call_operand.vmem [shape: f32[128,1], index: 2, kind: input, shape index: {}]
  %s3 = inlined_call_operand.vmem [shape: bf16[128,128], index: 3, kind: input, shape index: {}]
  %s4 = inlined_call_operand.vmem [shape: f32[128,1], index: 4, kind: input, shape index: {}]
  %s5 = inlined_call_operand.vmem [shape: f32[128,1], index: 5, kind: input, shape index: {}]
  %s6 = inlined_call_operand.<no memory space> [shape: f32[1,1], index: 6, kind: input, shape index: {}]
  %s7 = inlined_call_operand.hbm [shape: f32[1,1,256], index: 7, kind: output, shape index: {}]
  %s8 = sld [smem:[#allocation0]]
  $region38: #{tpu_custom_call.1} parent=0
    _
  %s10 = ssub.s32 1, %s8
  %s11 = scalar_select 0, %s10, %s8
  %12 = sst [smem:[#allocation2]] %s6
  $region1: #{tpu_custom_call.1} parent=0
    #allocation3 [shape = 'u8[1024]{0}', space=vmem, size = 0x400, scoped, tag = 'output window, operand 0, single buffered']
    #allocation4 [shape = 's32[1]{0}', space=sflag, size = 0x4, scoped, tag = 'scoped memory for tpu_custom_call.1']
    %13 = vsyncpa [#allocation4], 0
    // Predicated region
    $region2: #{tpu_custom_call.1} parent=1 // pred_check
      _
    $region3: #{tpu_custom_call.1} parent=1 // pred_check_branch
      %15 = sbr.rel (0) target = $region5
    $region4: #{tpu_custom_call.1} parent=1 // pred_region
      _
    $region5: #{tpu_custom_call.1} parent=1 // pred_fallthru
      _
    // Predicated region
    $region6: #{tpu_custom_call.1} parent=1 // pred_check
      _
    $region7: #{tpu_custom_call.1} parent=1 // pred_check_branch
      %17 = sbr.rel (0) target = $region9
    $region8: #{tpu_custom_call.1} parent=1 // pred_region
      _
    $region9: #{tpu_custom_call.1} parent=1 // pred_fallthru
      _
    // Predicated region
    $region10: #{tpu_custom_call.1} parent=1 // pred_check
      _
    $region11: #{tpu_custom_call.1} parent=1 // pred_check_branch
      %19 = sbr.rel (0) target = $region13
    $region12: #{tpu_custom_call.1} parent=1 // pred_region
      _
    $region13: #{tpu_custom_call.1} parent=1 // pred_fallthru
      _
    // Predicated region
    $region14: #{tpu_custom_call.1} parent=1 // pred_check
      _
    $region15: #{tpu_custom_call.1} parent=1 // pred_check_branch
      %21 = sbr.rel (0) target = $region17
    $region16: #{tpu_custom_call.1} parent=1 // pred_region
      _
    $region17: #{tpu_custom_call.1} parent=1 // pred_fallthru
      _
    // Predicated region
    $region18: #{tpu_custom_call.1} parent=1 // pred_check
      _
    $region19: #{tpu_custom_call.1} parent=1 // pred_check_branch
      %23 = sbr.rel (0) target = $region21
    $region20: #{tpu_custom_call.1} parent=1 // pred_region
      _
    $region21: #{tpu_custom_call.1} parent=1 // pred_fallthru
      _
    // Predicated region
    $region22: #{tpu_custom_call.1} parent=1 // pred_check
      _
    $region23: #{tpu_custom_call.1} parent=1 // pred_check_branch
      %25 = sbr.rel (0) target = $region25
    $region24: #{tpu_custom_call.1} parent=1 // pred_region
      _
    $region25: #{tpu_custom_call.1} parent=1 // pred_fallthru
      _
    // Predicated region
    $region26: #{tpu_custom_call.1} parent=1 // pred_check
      _
    $region27: #{tpu_custom_call.1} parent=1 // pred_check_branch
      %27 = sbr.rel (0) target = $region29
    $region28: #{tpu_custom_call.1} parent=1 // pred_region
      _
    $region29: #{tpu_custom_call.1} parent=1 // pred_fallthru
      _
    %v29 = vld [vmem:[%s1] sm:$0xf]
    %v30 = vld [vmem:[%s1 + $0x4] sm:$0xf]
    %v31 = vld [vmem:[%s1 + $0x8] sm:$0xf]
    %v32 = vld [vmem:[%s1 + $0xc] sm:$0xf]
    %v33 = vld [vmem:[%s1 + $0x10] sm:$0xf]
    %v34 = vld [vmem:[%s1 + $0x14] sm:$0xf]
    %v35 = vld [vmem:[%s1 + $0x18] sm:$0xf]
    %v36 = vld [vmem:[%s1 + $0x1c] sm:$0xf]
    %v37 = vld [vmem:[%s1 + $0x20] sm:$0xf]
    %v38 = vld [vmem:[%s1 + $0x24] sm:$0xf]
    %v39 = vld [vmem:[%s1 + $0x28] sm:$0xf]
    %v40 = vld [vmem:[%s1 + $0x2c] sm:$0xf]
    %v41 = vld [vmem:[%s1 + $0x30] sm:$0xf]
    %v42 = vld [vmem:[%s1 + $0x34] sm:$0xf]
    %v43 = vld [vmem:[%s1 + $0x38] sm:$0xf]
    %v44 = vld [vmem:[%s1 + $0x3c] sm:$0xf]
    %v45 = vld [vmem:[%s0] sm:$0xf]
    %v46 = vld [vmem:[%s0 + $0x4] sm:$0xf]
    %v47 = vld [vmem:[%s0 + $0x8] sm:$0xf]
    %v48 = vld [vmem:[%s0 + $0xc] sm:$0xf]
    %v49 = vld [vmem:[%s0 + $0x10] sm:$0xf]
    %v50 = vld [vmem:[%s0 + $0x14] sm:$0xf]
    %v51 = vld [vmem:[%s0 + $0x18] sm:$0xf]
    %v52 = vld [vmem:[%s0 + $0x1c] sm:$0xf]
    %v53 = vld [vmem:[%s0 + $0x20] sm:$0xf]
    %v54 = vld [vmem:[%s0 + $0x24] sm:$0xf]
    %v55 = vld [vmem:[%s0 + $0x28] sm:$0xf]
    %v56 = vld [vmem:[%s0 + $0x2c] sm:$0xf]
    %v57 = vld [vmem:[%s0 + $0x30] sm:$0xf]
    %v58 = vld [vmem:[%s0 + $0x34] sm:$0xf]
    %v59 = vld [vmem:[%s0 + $0x38] sm:$0xf]
    %v60 = vld [vmem:[%s0 + $0x3c] sm:$0xf]
    %v61 = vld [vmem:[%s0 + $0x40] sm:$0xf]
    %v62 = vld [vmem:[%s0 + $0x44] sm:$0xf]
    %v63 = vld [vmem:[%s0 + $0x48] sm:$0xf]
    %v64 = vld [vmem:[%s0 + $0x4c] sm:$0xf]
    %v65 = vld [vmem:[%s0 + $0x50] sm:$0xf]
    %v66 = vld [vmem:[%s0 + $0x54] sm:$0xf]
    %v67 = vld [vmem:[%s0 + $0x58] sm:$0xf]
    %v68 = vld [vmem:[%s0 + $0x5c] sm:$0xf]
    %v69 = vld [vmem:[%s0 + $0x60] sm:$0xf]
    %v70 = vld [vmem:[%s0 + $0x64] sm:$0xf]
    %v71 = vld [vmem:[%s0 + $0x68] sm:$0xf]
    %v72 = vld [vmem:[%s0 + $0x6c] sm:$0xf]
    %v73 = vld [vmem:[%s0 + $0x70] sm:$0xf]
    %v74 = vld [vmem:[%s0 + $0x74] sm:$0xf]
    %v75 = vld [vmem:[%s0 + $0x78] sm:$0xf]
    %v76 = vld [vmem:[%s0 + $0x7c] sm:$0xf]
    %v77 = vld [vmem:[%s2] sm:$0xff]
    %v78 = vld [vmem:[%s2 + $0x8] sm:$0xff]
    %v79 = vld [vmem:[%s2 + $0x10] sm:$0xff]
    %v80 = vld [vmem:[%s2 + $0x18] sm:$0xff]
    %v81 = vld [vmem:[%s2 + $0x20] sm:$0xff]
    %v82 = vld [vmem:[%s2 + $0x28] sm:$0xff]
    %v83 = vld [vmem:[%s2 + $0x30] sm:$0xff]
    %v84 = vld [vmem:[%s2 + $0x38] sm:$0xff]
    %v85 = vld [vmem:[%s2 + $0x40] sm:$0xff]
    %v86 = vld [vmem:[%s2 + $0x48] sm:$0xff]
    %v87 = vld [vmem:[%s2 + $0x50] sm:$0xff]
    %v88 = vld [vmem:[%s2 + $0x58] sm:$0xff]
    %v89 = vld [vmem:[%s2 + $0x60] sm:$0xff]
    %v90 = vld [vmem:[%s2 + $0x68] sm:$0xff]
    %v91 = vld [vmem:[%s2 + $0x70] sm:$0xff]
    %v92 = vld [vmem:[%s2 + $0x78] sm:$0xff]
    %94 = vset.pattern.permute.xlu0 0
    %95 = vperm.xlu0 %94, %v77
    %v96 = vpop.permute.xlu0 %95
    %99 = vset.pattern.permute.xlu0 0
    %100 = vperm.xlu0 %99, %v78
    %v101 = vpop.permute.xlu0 %100
    %104 = vset.pattern.permute.xlu0 0
    %105 = vperm.xlu0 %104, %v79
    %v106 = vpop.permute.xlu0 %105
    %109 = vset.pattern.permute.xlu0 0
    %110 = vperm.xlu0 %109, %v80
    %v111 = vpop.permute.xlu0 %110
    %114 = vset.pattern.permute.xlu0 0
    %115 = vperm.xlu0 %114, %v81
    %v116 = vpop.permute.xlu0 %115
    %119 = vset.pattern.permute.xlu0 0
    %120 = vperm.xlu0 %119, %v82
    %v121 = vpop.permute.xlu0 %120
    %124 = vset.pattern.permute.xlu0 0
    %125 = vperm.xlu0 %124, %v83
    %v126 = vpop.permute.xlu0 %125
    %129 = vset.pattern.permute.xlu0 0
    %130 = vperm.xlu0 %129, %v84
    %v131 = vpop.permute.xlu0 %130
    %134 = vset.pattern.permute.xlu0 0
    %135 = vperm.xlu0 %134, %v85
    %v136 = vpop.permute.xlu0 %135
    %139 = vset.pattern.permute.xlu0 0
    %140 = vperm.xlu0 %139, %v86
    %v141 = vpop.permute.xlu0 %140
    %144 = vset.pattern.permute.xlu0 0
    %145 = vperm.xlu0 %144, %v87
    %v146 = vpop.permute.xlu0 %145
    %149 = vset.pattern.permute.xlu0 0
    %150 = vperm.xlu0 %149, %v88
    %v151 = vpop.permute.xlu0 %150
    %154 = vset.pattern.permute.xlu0 0
    %155 = vperm.xlu0 %154, %v89
    %v156 = vpop.permute.xlu0 %155
    %159 = vset.pattern.permute.xlu0 0
    %160 = vperm.xlu0 %159, %v90
    %v161 = vpop.permute.xlu0 %160
    %164 = vset.pattern.permute.xlu0 0
    %165 = vperm.xlu0 %164, %v91
    %v166 = vpop.permute.xlu0 %165
    %169 = vset.pattern.permute.xlu0 0
    %170 = vperm.xlu0 %169, %v92
    %v171 = vpop.permute.xlu0 %170
    %v189 = vunpack.c.l.b16 %v29
    %v190 = vunpack.c.l.b16 %v30
    %v191 = vunpack.c.l.b16 %v31
    %v192 = vunpack.c.l.b16 %v32
    %v193 = vunpack.c.l.b16 %v33
    %v194 = vunpack.c.l.b16 %v34
    %v195 = vunpack.c.l.b16 %v35
    %v196 = vunpack.c.l.b16 %v36
    %v197 = vunpack.c.l.b16 %v37
    %v198 = vunpack.c.l.b16 %v38
    %v199 = vunpack.c.l.b16 %v39
    %v200 = vunpack.c.l.b16 %v40
    %v201 = vunpack.c.l.b16 %v41
    %v202 = vunpack.c.l.b16 %v42
    %v203 = vunpack.c.l.b16 %v43
    %v204 = vunpack.c.l.b16 %v44
    %v205 = vpack.c.b16 %v190, %v189
    %v206 = vpack.c.b16 %v192, %v191
    %v207 = vpack.c.b16 %v194, %v193
    %v208 = vpack.c.b16 %v196, %v195
    %v209 = vpack.c.b16 %v198, %v197
    %v210 = vpack.c.b16 %v200, %v199
    %v211 = vpack.c.b16 %v202, %v201
    %v212 = vpack.c.b16 %v204, %v203
    %v245 = vunpack.c.l.b16 %v45
    %v246 = vunpack.c.l.b16 %v46
    %v247 = vunpack.c.l.b16 %v47
    %v248 = vunpack.c.l.b16 %v48
    %v249 = vunpack.c.l.b16 %v49
    %v250 = vunpack.c.l.b16 %v50
    %v251 = vunpack.c.l.b16 %v51
    %v252 = vunpack.c.l.b16 %v52
    %v253 = vunpack.c.l.b16 %v53
    %v254 = vunpack.c.l.b16 %v54
    %v255 = vunpack.c.l.b16 %v55
    %v256 = vunpack.c.l.b16 %v56
    %v257 = vunpack.c.l.b16 %v57
    %v258 = vunpack.c.l.b16 %v58
    %v259 = vunpack.c.l.b16 %v59
    %v260 = vunpack.c.l.b16 %v60
    %v261 = vunpack.c.l.b16 %v61
    %v262 = vunpack.c.l.b16 %v62
    %v263 = vunpack.c.l.b16 %v63
    %v264 = vunpack.c.l.b16 %v64
    %v265 = vunpack.c.l.b16 %v65
    %v266 = vunpack.c.l.b16 %v66
    %v267 = vunpack.c.l.b16 %v67
    %v268 = vunpack.c.l.b16 %v68
    %v269 = vunpack.c.l.b16 %v69
    %v270 = vunpack.c.l.b16 %v70
    %v271 = vunpack.c.l.b16 %v71
    %v272 = vunpack.c.l.b16 %v72
    %v273 = vunpack.c.l.b16 %v73
    %v274 = vunpack.c.l.b16 %v74
    %v275 = vunpack.c.l.b16 %v75
    %v276 = vunpack.c.l.b16 %v76
    %v277 = vpack.c.b16 %v246, %v245
    %v278 = vpack.c.b16 %v248, %v247
    %v279 = vpack.c.b16 %v250, %v249
    %v280 = vpack.c.b16 %v252, %v251
    %v281 = vpack.c.b16 %v254, %v253
    %v282 = vpack.c.b16 %v256, %v255
    %v283 = vpack.c.b16 %v258, %v257
    %v284 = vpack.c.b16 %v260, %v259
    %v285 = vpack.c.b16 %v262, %v261
    %v286 = vpack.c.b16 %v264, %v263
    %v287 = vpack.c.b16 %v266, %v265
    %v288 = vpack.c.b16 %v268, %v267
    %v289 = vpack.c.b16 %v270, %v269
    %v290 = vpack.c.b16 %v272, %v271
    %v291 = vpack.c.b16 %v274, %v273
    %v292 = vpack.c.b16 %v276, %v275
    %vm293 = vcmask 261120
    %v295 = vsel %vm293, %v205, 0
    %v298 = vsel %vm293, %v206, 0
    %v301 = vsel %vm293, %v207, 0
    %v304 = vsel %vm293, %v208, 0
    %v307 = vsel %vm293, %v209, 0
    %v310 = vsel %vm293, %v210, 0
    %v313 = vsel %vm293, %v211, 0
    %v316 = vsel %vm293, %v212, 0
    %v319 = vsel %vm293, %v277, 0
    %v322 = vsel %vm293, %v278, 0
    %v325 = vsel %vm293, %v279, 0
    %v328 = vsel %vm293, %v280, 0
    %v331 = vsel %vm293, %v281, 0
    %v334 = vsel %vm293, %v282, 0
    %v337 = vsel %vm293, %v283, 0
    %v340 = vsel %vm293, %v284, 0
    %v343 = vsel %vm293, %v285, 0
    %v346 = vsel %vm293, %v286, 0
    %v349 = vsel %vm293, %v287, 0
    %v352 = vsel %vm293, %v288, 0
    %v355 = vsel %vm293, %v289, 0
    %v358 = vsel %vm293, %v290, 0
    %v361 = vsel %vm293, %v291, 0
    %v364 = vsel %vm293, %v292, 0
    %366 = vmatprep.subr.bf16.mxu0 0
    %367 = vmatpush1.bf16.xpose.msra.mxu0 %v319
    %368 = vmatprep.subr.bf16.mxu0 0
    %369 = vmatpush1.bf16.xpose.msra.mxu0 %v322
    %370 = vmatprep.subr.bf16.mxu0 0
    %371 = vmatpush1.bf16.xpose.msra.mxu0 %v325
    %372 = vmatprep.subr.bf16.mxu0 0
    %373 = vmatpush1.bf16.xpose.msra.mxu0 %v328
    %374 = vmatprep.subr.bf16.mxu0 0
    %375 = vmatpush1.bf16.xpose.msra.mxu0 %v331
    %376 = vmatprep.subr.bf16.mxu0 0
    %377 = vmatpush1.bf16.xpose.msra.mxu0 %v334
    %378 = vmatprep.subr.bf16.mxu0 0
    %379 = vmatpush1.bf16.xpose.msra.mxu0 %v337
    %380 = vmatprep.subr.bf16.mxu0 0
    %381 = vmatpush1.bf16.xpose.msra.mxu0 %v340
    %382 = vmatprep.subr.bf16.mxu0 0
    %383 = vmatpush1.bf16.xpose.msra.mxu0 %v343
    %384 = vmatprep.subr.bf16.mxu0 0
    %385 = vmatpush1.bf16.xpose.msra.mxu0 %v346
    %386 = vmatprep.subr.bf16.mxu0 0
    %387 = vmatpush1.bf16.xpose.msra.mxu0 %v349
    %388 = vmatprep.subr.bf16.mxu0 0
    %389 = vmatpush1.bf16.xpose.msra.mxu0 %v352
    %390 = vmatprep.subr.bf16.mxu0 0
    %391 = vmatpush1.bf16.xpose.msra.mxu0 %v355
    %392 = vmatprep.subr.bf16.mxu0 0
    %393 = vmatpush1.bf16.xpose.msra.mxu0 %v358
    %394 = vmatprep.subr.bf16.mxu0 0
    %395 = vmatpush1.bf16.xpose.msra.mxu0 %v361
    %396 = vmatprep.subr.bf16.mxu0 0
    %397 = vmatpush1.bf16.xpose.msra.mxu0 %v364
    %398 = vmatprep.mubr.bf16.mxu0 0
    %399 = vmatmul.mubr.bf16.gmra.mrb[0].mxu0 %v295
    %v400 = vpop.f32.mrb[0].mxu0
    %v401 = vadd.f32 %v96, %v400
    %v402 = vpop.f32.mrb[0].mxu0
    %v403 = vadd.f32 %v96, %v402
    %v404 = vpop.f32.mrb[0].mxu0
    %v405 = vadd.f32 %v101, %v404
    %v406 = vpop.f32.mrb[0].mxu0
    %v407 = vadd.f32 %v101, %v406
    %408 = vmatprep.mubr.bf16.mxu0 0
    %409 = vmatmul.mubr.bf16.gmra.mrb[0].mxu0 %v298
    %v410 = vpop.f32.mrb[0].mxu0
    %v411 = vadd.f32 %v106, %v410
    %v412 = vpop.f32.mrb[0].mxu0
    %v413 = vadd.f32 %v106, %v412
    %v414 = vpop.f32.mrb[0].mxu0
    %v415 = vadd.f32 %v111, %v414
    %v416 = vpop.f32.mrb[0].mxu0
    %v417 = vadd.f32 %v111, %v416
    %418 = vmatprep.mubr.bf16.mxu0 0
    %419 = vmatmul.mubr.bf16.gmra.mrb[0].mxu0 %v301
    %v420 = vpop.f32.mrb[0].mxu0
    %v421 = vadd.f32 %v116, %v420
    %v422 = vpop.f32.mrb[0].mxu0
    %v423 = vadd.f32 %v116, %v422
    %v424 = vpop.f32.mrb[0].mxu0
    %v425 = vadd.f32 %v121, %v424
    %v426 = vpop.f32.mrb[0].mxu0
    %v427 = vadd.f32 %v121, %v426
    %428 = vmatprep.mubr.bf16.mxu0 0
    %429 = vmatmul.mubr.bf16.gmra.mrb[0].mxu0 %v304
    %v430 = vpop.f32.mrb[0].mxu0
    %v431 = vadd.f32 %v126, %v430
    %v432 = vpop.f32.mrb[0].mxu0
    %v433 = vadd.f32 %v126, %v432
    %v434 = vpop.f32.mrb[0].mxu0
    %v435 = vadd.f32 %v131, %v434
    %v436 = vpop.f32.mrb[0].mxu0
    %v437 = vadd.f32 %v131, %v436
    %438 = vmatprep.mubr.bf16.mxu0 0
    %439 = vmatmul.mubr.bf16.gmra.mrb[0].mxu0 %v307
    %v440 = vpop.f32.mrb[0].mxu0
    %v441 = vadd.f32 %v136, %v440
    %v442 = vpop.f32.mrb[0].mxu0
    %v443 = vadd.f32 %v136, %v442
    %v444 = vpop.f32.mrb[0].mxu0
    %v445 = vadd.f32 %v141, %v444
    %v446 = vpop.f32.mrb[0].mxu0
    %v447 = vadd.f32 %v141, %v446
    %448 = vmatprep.mubr.bf16.mxu0 0
    %449 = vmatmul.mubr.bf16.gmra.mrb[0].mxu0 %v310
    %v450 = vpop.f32.mrb[0].mxu0
    %v451 = vadd.f32 %v146, %v450
    %v452 = vpop.f32.mrb[0].mxu0
    %v453 = vadd.f32 %v146, %v452
    %v454 = vpop.f32.mrb[0].mxu0
    %v455 = vadd.f32 %v151, %v454
    %v456 = vpop.f32.mrb[0].mxu0
    %v457 = vadd.f32 %v151, %v456
    %458 = vmatprep.mubr.bf16.mxu0 0
    %459 = vmatmul.mubr.bf16.gmra.mrb[0].mxu0 %v313
    %v460 = vpop.f32.mrb[0].mxu0
    %v461 = vadd.f32 %v156, %v460
    %v462 = vpop.f32.mrb[0].mxu0
    %v463 = vadd.f32 %v156, %v462
    %v464 = vpop.f32.mrb[0].mxu0
    %v465 = vadd.f32 %v161, %v464
    %v466 = vpop.f32.mrb[0].mxu0
    %v467 = vadd.f32 %v161, %v466
    %468 = vmatprep.mubr.bf16.mxu0 0
    %469 = vmatmul.mubr.bf16.gmra.mrb[0].mxu0 %v316
    %v470 = vpop.f32.mrb[0].mxu0
    %v471 = vadd.f32 %v166, %v470
    %v472 = vpop.f32.mrb[0].mxu0
    %v473 = vadd.f32 %v166, %v472
    %v474 = vpop.f32.mrb[0].mxu0
    %v475 = vadd.f32 %v171, %v474
    %v476 = vpop.f32.mrb[0].mxu0
    %v477 = vadd.f32 %v171, %v476
    %478 = vdwg.mxu0
    %v479 = vmax.f32 %v401, 0.0
    %v480 = vmax.f32 %v403, 0.0
    %v481 = vmax.f32 %v405, 0.0
    %v482 = vmax.f32 %v407, 0.0
    %v483 = vmax.f32 %v411, 0.0
    %v484 = vmax.f32 %v413, 0.0
    %v485 = vmax.f32 %v415, 0.0
    %v486 = vmax.f32 %v417, 0.0
    %v487 = vmax.f32 %v421, 0.0
    %v488 = vmax.f32 %v423, 0.0
    %v489 = vmax.f32 %v425, 0.0
    %v490 = vmax.f32 %v427, 0.0
    %v491 = vmax.f32 %v431, 0.0
    %v492 = vmax.f32 %v433, 0.0
    %v493 = vmax.f32 %v435, 0.0
    %v494 = vmax.f32 %v437, 0.0
    %v495 = vmax.f32 %v441, 0.0
    %v496 = vmax.f32 %v443, 0.0
    %v497 = vmax.f32 %v445, 0.0
    %v498 = vmax.f32 %v447, 0.0
    %v499 = vmax.f32 %v451, 0.0
    %v500 = vmax.f32 %v453, 0.0
    %v501 = vmax.f32 %v455, 0.0
    %v502 = vmax.f32 %v457, 0.0
    %v503 = vmax.f32 %v461, 0.0
    %v504 = vmax.f32 %v463, 0.0
    %v505 = vmax.f32 %v465, 0.0
    %v506 = vmax.f32 %v467, 0.0
    %v507 = vmax.f32 %v471, 0.0
    %v508 = vmax.f32 %v473, 0.0
    %v509 = vmax.f32 %v475, 0.0
    %v510 = vmax.f32 %v477, 0.0
    %v511 = vld [vmem:[%s3] sm:$0xf]
    %v512 = vld [vmem:[%s3 + $0x4] sm:$0xf]
    %v513 = vld [vmem:[%s3 + $0x8] sm:$0xf]
    %v514 = vld [vmem:[%s3 + $0xc] sm:$0xf]
    %v515 = vld [vmem:[%s3 + $0x10] sm:$0xf]
    %v516 = vld [vmem:[%s3 + $0x14] sm:$0xf]
    %v517 = vld [vmem:[%s3 + $0x18] sm:$0xf]
    %v518 = vld [vmem:[%s3 + $0x1c] sm:$0xf]
    %v519 = vld [vmem:[%s3 + $0x20] sm:$0xf]
    %v520 = vld [vmem:[%s3 + $0x24] sm:$0xf]
    %v521 = vld [vmem:[%s3 + $0x28] sm:$0xf]
    %v522 = vld [vmem:[%s3 + $0x2c] sm:$0xf]
    %v523 = vld [vmem:[%s3 + $0x30] sm:$0xf]
    %v524 = vld [vmem:[%s3 + $0x34] sm:$0xf]
    %v525 = vld [vmem:[%s3 + $0x38] sm:$0xf]
    %v526 = vld [vmem:[%s3 + $0x3c] sm:$0xf]
    %v527 = vpack.c.bf16 %v481, %v479
    %v528 = vpack.c.bf16 %v482, %v480
    %v529 = vpack.c.bf16 %v485, %v483
    %v530 = vpack.c.bf16 %v486, %v484
    %v531 = vpack.c.bf16 %v489, %v487
    %v532 = vpack.c.bf16 %v490, %v488
    %v533 = vpack.c.bf16 %v493, %v491
    %v534 = vpack.c.bf16 %v494, %v492
    %v535 = vpack.c.bf16 %v497, %v495
    %v536 = vpack.c.bf16 %v498, %v496
    %v537 = vpack.c.bf16 %v501, %v499
    %v538 = vpack.c.bf16 %v502, %v500
    %v539 = vpack.c.bf16 %v505, %v503
    %v540 = vpack.c.bf16 %v506, %v504
    %v541 = vpack.c.bf16 %v509, %v507
    %v542 = vpack.c.bf16 %v510, %v508
    %v543 = vld [vmem:[%s4] sm:$0xff]
    %v544 = vld [vmem:[%s4 + $0x8] sm:$0xff]
    %v545 = vld [vmem:[%s4 + $0x10] sm:$0xff]
    %v546 = vld [vmem:[%s4 + $0x18] sm:$0xff]
    %v547 = vld [vmem:[%s4 + $0x20] sm:$0xff]
    %v548 = vld [vmem:[%s4 + $0x28] sm:$0xff]
    %v549 = vld [vmem:[%s4 + $0x30] sm:$0xff]
    %v550 = vld [vmem:[%s4 + $0x38] sm:$0xff]
    %v551 = vld [vmem:[%s4 + $0x40] sm:$0xff]
    %v552 = vld [vmem:[%s4 + $0x48] sm:$0xff]
    %v553 = vld [vmem:[%s4 + $0x50] sm:$0xff]
    %v554 = vld [vmem:[%s4 + $0x58] sm:$0xff]
    %v555 = vld [vmem:[%s4 + $0x60] sm:$0xff]
    %v556 = vld [vmem:[%s4 + $0x68] sm:$0xff]
    %v557 = vld [vmem:[%s4 + $0x70] sm:$0xff]
    %v558 = vld [vmem:[%s4 + $0x78] sm:$0xff]
    %560 = vset.pattern.permute.xlu0 0
    %561 = vperm.xlu0 %560, %v543
    %v562 = vpop.permute.xlu0 %561
    %565 = vset.pattern.permute.xlu0 0
    %566 = vperm.xlu0 %565, %v544
    %v567 = vpop.permute.xlu0 %566
    %570 = vset.pattern.permute.xlu0 0
    %571 = vperm.xlu0 %570, %v545
    %v572 = vpop.permute.xlu0 %571
    %575 = vset.pattern.permute.xlu0 0
    %576 = vperm.xlu0 %575, %v546
    %v577 = vpop.permute.xlu0 %576
    %580 = vset.pattern.permute.xlu0 0
    %581 = vperm.xlu0 %580, %v547
    %v582 = vpop.permute.xlu0 %581
    %585 = vset.pattern.permute.xlu0 0
    %586 = vperm.xlu0 %585, %v548
    %v587 = vpop.permute.xlu0 %586
    %590 = vset.pattern.permute.xlu0 0
    %591 = vperm.xlu0 %590, %v549
    %v592 = vpop.permute.xlu0 %591
    %595 = vset.pattern.permute.xlu0 0
    %596 = vperm.xlu0 %595, %v550
    %v597 = vpop.permute.xlu0 %596
    %600 = vset.pattern.permute.xlu0 0
    %601 = vperm.xlu0 %600, %v551
    %v602 = vpop.permute.xlu0 %601
    %605 = vset.pattern.permute.xlu0 0
    %606 = vperm.xlu0 %605, %v552
    %v607 = vpop.permute.xlu0 %606
    %610 = vset.pattern.permute.xlu0 0
    %611 = vperm.xlu0 %610, %v553
    %v612 = vpop.permute.xlu0 %611
    %615 = vset.pattern.permute.xlu0 0
    %616 = vperm.xlu0 %615, %v554
    %v617 = vpop.permute.xlu0 %616
    %620 = vset.pattern.permute.xlu0 0
    %621 = vperm.xlu0 %620, %v555
    %v622 = vpop.permute.xlu0 %621
    %625 = vset.pattern.permute.xlu0 0
    %626 = vperm.xlu0 %625, %v556
    %v627 = vpop.permute.xlu0 %626
    %630 = vset.pattern.permute.xlu0 0
    %631 = vperm.xlu0 %630, %v557
    %v632 = vpop.permute.xlu0 %631
    %635 = vset.pattern.permute.xlu0 0
    %636 = vperm.xlu0 %635, %v558
    %v637 = vpop.permute.xlu0 %636
    %v655 = vunpack.c.l.b16 %v511
    %v656 = vunpack.c.l.b16 %v512
    %v657 = vunpack.c.l.b16 %v513
    %v658 = vunpack.c.l.b16 %v514
    %v659 = vunpack.c.l.b16 %v515
    %v660 = vunpack.c.l.b16 %v516
    %v661 = vunpack.c.l.b16 %v517
    %v662 = vunpack.c.l.b16 %v518
    %v663 = vunpack.c.l.b16 %v519
    %v664 = vunpack.c.l.b16 %v520
    %v665 = vunpack.c.l.b16 %v521
    %v666 = vunpack.c.l.b16 %v522
    %v667 = vunpack.c.l.b16 %v523
    %v668 = vunpack.c.l.b16 %v524
    %v669 = vunpack.c.l.b16 %v525
    %v670 = vunpack.c.l.b16 %v526
    %v671 = vpack.c.b16 %v656, %v655
    %v672 = vpack.c.b16 %v658, %v657
    %v673 = vpack.c.b16 %v660, %v659
    %v674 = vpack.c.b16 %v662, %v661
    %v675 = vpack.c.b16 %v664, %v663
    %v676 = vpack.c.b16 %v666, %v665
    %v677 = vpack.c.b16 %v668, %v667
    %v678 = vpack.c.b16 %v670, %v669
    %687 = vmatprep.subr.bf16.mxu0 %v528
    %688 = vmatpush1.bf16.msra.mxu0 %v527
    %689 = vmatprep.subr.bf16.mxu0 %v530
    %690 = vmatpush1.bf16.msra.mxu0 %v529
    %691 = vmatprep.subr.bf16.mxu0 %v532
    %692 = vmatpush1.bf16.msra.mxu0 %v531
    %693 = vmatprep.subr.bf16.mxu0 %v534
    %694 = vmatpush1.bf16.msra.mxu0 %v533
    %695 = vmatprep.subr.bf16.mxu0 %v536
    %696 = vmatpush1.bf16.msra.mxu0 %v535
    %697 = vmatprep.subr.bf16.mxu0 %v538
    %698 = vmatpush1.bf16.msra.mxu0 %v537
    %699 = vmatprep.subr.bf16.mxu0 %v540
    %700 = vmatpush1.bf16.msra.mxu0 %v539
    %701 = vmatprep.subr.bf16.mxu0 %v542
    %702 = vmatpush1.bf16.msra.mxu0 %v541
    %703 = vmatprep.subr.bf16.mxu0 0
    %704 = vmatpush1.bf16.msra.mxu0 0
    %705 = vmatprep.subr.bf16.mxu0 0
    %706 = vmatpush1.bf16.msra.mxu0 0
    %707 = vmatprep.subr.bf16.mxu0 0
    %708 = vmatpush1.bf16.msra.mxu0 0
    %709 = vmatprep.subr.bf16.mxu0 0
    %710 = vmatpush1.bf16.msra.mxu0 0
    %711 = vmatprep.subr.bf16.mxu0 0
    %712 = vmatpush1.bf16.msra.mxu0 0
    %713 = vmatprep.subr.bf16.mxu0 0
    %714 = vmatpush1.bf16.msra.mxu0 0
    %715 = vmatprep.subr.bf16.mxu0 0
    %716 = vmatpush1.bf16.msra.mxu0 0
    %717 = vmatprep.subr.bf16.mxu0 0
    %718 = vmatpush1.bf16.msra.mxu0 0
    %719 = vmatprep.mubr.bf16.mxu0 0
    %720 = vmatmul.mubr.bf16.gmra.mrb[0].mxu0 %v671
    %v721 = vpop.f32.mrb[0].mxu0
    %v722 = vadd.f32 %v562, %v721
    %v723 = vpop.f32.mrb[0].mxu0
    %v724 = vadd.f32 %v562, %v723
    %v725 = vpop.f32.mrb[0].mxu0
    %v726 = vadd.f32 %v567, %v725
    %v727 = vpop.f32.mrb[0].mxu0
    %v728 = vadd.f32 %v567, %v727
    %729 = vmatprep.mubr.bf16.mxu0 0
    %730 = vmatmul.mubr.bf16.gmra.mrb[0].mxu0 %v672
    %v731 = vpop.f32.mrb[0].mxu0
    %v732 = vadd.f32 %v572, %v731
    %v733 = vpop.f32.mrb[0].mxu0
    %v734 = vadd.f32 %v572, %v733
    %v735 = vpop.f32.mrb[0].mxu0
    %v736 = vadd.f32 %v577, %v735
    %v737 = vpop.f32.mrb[0].mxu0
    %v738 = vadd.f32 %v577, %v737
    %739 = vmatprep.mubr.bf16.mxu0 0
    %740 = vmatmul.mubr.bf16.gmra.mrb[0].mxu0 %v673
    %v741 = vpop.f32.mrb[0].mxu0
    %v742 = vadd.f32 %v582, %v741
    %v743 = vpop.f32.mrb[0].mxu0
    %v744 = vadd.f32 %v582, %v743
    %v745 = vpop.f32.mrb[0].mxu0
    %v746 = vadd.f32 %v587, %v745
    %v747 = vpop.f32.mrb[0].mxu0
    %v748 = vadd.f32 %v587, %v747
    %749 = vmatprep.mubr.bf16.mxu0 0
    %750 = vmatmul.mubr.bf16.gmra.mrb[0].mxu0 %v674
    %v751 = vpop.f32.mrb[0].mxu0
    %v752 = vadd.f32 %v592, %v751
    %v753 = vpop.f32.mrb[0].mxu0
    %v754 = vadd.f32 %v592, %v753
    %v755 = vpop.f32.mrb[0].mxu0
    %v756 = vadd.f32 %v597, %v755
    %v757 = vpop.f32.mrb[0].mxu0
    %v758 = vadd.f32 %v597, %v757
    %759 = vmatprep.mubr.bf16.mxu0 0
    %760 = vmatmul.mubr.bf16.gmra.mrb[0].mxu0 %v675
    %v761 = vpop.f32.mrb[0].mxu0
    %v762 = vadd.f32 %v602, %v761
    %v763 = vpop.f32.mrb[0].mxu0
    %v764 = vadd.f32 %v602, %v763
    %v765 = vpop.f32.mrb[0].mxu0
    %v766 = vadd.f32 %v607, %v765
    %v767 = vpop.f32.mrb[0].mxu0
    %v768 = vadd.f32 %v607, %v767
    %769 = vmatprep.mubr.bf16.mxu0 0
    %770 = vmatmul.mubr.bf16.gmra.mrb[0].mxu0 %v676
    %v771 = vpop.f32.mrb[0].mxu0
    %v772 = vadd.f32 %v612, %v771
    %v773 = vpop.f32.mrb[0].mxu0
    %v774 = vadd.f32 %v612, %v773
    %v775 = vpop.f32.mrb[0].mxu0
    %v776 = vadd.f32 %v617, %v775
    %v777 = vpop.f32.mrb[0].mxu0
    %v778 = vadd.f32 %v617, %v777
    %779 = vmatprep.mubr.bf16.mxu0 0
    %780 = vmatmul.mubr.bf16.gmra.mrb[0].mxu0 %v677
    %v781 = vpop.f32.mrb[0].mxu0
    %v782 = vadd.f32 %v622, %v781
    %v783 = vpop.f32.mrb[0].mxu0
    %v784 = vadd.f32 %v622, %v783
    %v785 = vpop.f32.mrb[0].mxu0
    %v786 = vadd.f32 %v627, %v785
    %v787 = vpop.f32.mrb[0].mxu0
    %v788 = vadd.f32 %v627, %v787
    %789 = vmatprep.mubr.bf16.mxu0 0
    %790 = vmatmul.mubr.bf16.gmra.mrb[0].mxu0 %v678
    %v791 = vpop.f32.mrb[0].mxu0
    %v792 = vadd.f32 %v632, %v791
    %v793 = vpop.f32.mrb[0].mxu0
    %v794 = vadd.f32 %v632, %v793
    %v795 = vpop.f32.mrb[0].mxu0
    %v796 = vadd.f32 %v637, %v795
    %v797 = vpop.f32.mrb[0].mxu0
    %v798 = vadd.f32 %v637, %v797
    %799 = vdwg.mxu0
    %v800 = vmax.f32 %v722, 0.0
    %v801 = vmax.f32 %v724, 0.0
    %v802 = vmax.f32 %v726, 0.0
    %v803 = vmax.f32 %v728, 0.0
    %v804 = vmax.f32 %v732, 0.0
    %v805 = vmax.f32 %v734, 0.0
    %v806 = vmax.f32 %v736, 0.0
    %v807 = vmax.f32 %v738, 0.0
    %v808 = vmax.f32 %v742, 0.0
    %v809 = vmax.f32 %v744, 0.0
    %v810 = vmax.f32 %v746, 0.0
    %v811 = vmax.f32 %v748, 0.0
    %v812 = vmax.f32 %v752, 0.0
    %v813 = vmax.f32 %v754, 0.0
    %v814 = vmax.f32 %v756, 0.0
    %v815 = vmax.f32 %v758, 0.0
    %v816 = vmax.f32 %v762, 0.0
    %v817 = vmax.f32 %v764, 0.0
    %v818 = vmax.f32 %v766, 0.0
    %v819 = vmax.f32 %v768, 0.0
    %v820 = vmax.f32 %v772, 0.0
    %v821 = vmax.f32 %v774, 0.0
    %v822 = vmax.f32 %v776, 0.0
    %v823 = vmax.f32 %v778, 0.0
    %v824 = vmax.f32 %v782, 0.0
    %v825 = vmax.f32 %v784, 0.0
    %v826 = vmax.f32 %v786, 0.0
    %v827 = vmax.f32 %v788, 0.0
    %v828 = vmax.f32 %v792, 0.0
    %v829 = vmax.f32 %v794, 0.0
    %v830 = vmax.f32 %v796, 0.0
    %v831 = vmax.f32 %v798, 0.0
    %v832 = vld [vmem:[%s5] sm:$0xff]
    %v833 = vld [vmem:[%s5 + $0x8] sm:$0xff]
    %v834 = vld [vmem:[%s5 + $0x10] sm:$0xff]
    %v835 = vld [vmem:[%s5 + $0x18] sm:$0xff]
    %v836 = vld [vmem:[%s5 + $0x20] sm:$0xff]
    %v837 = vld [vmem:[%s5 + $0x28] sm:$0xff]
    %v838 = vld [vmem:[%s5 + $0x30] sm:$0xff]
    %v839 = vld [vmem:[%s5 + $0x38] sm:$0xff]
    %v840 = vld [vmem:[%s5 + $0x40] sm:$0xff]
    %v841 = vld [vmem:[%s5 + $0x48] sm:$0xff]
    %v842 = vld [vmem:[%s5 + $0x50] sm:$0xff]
    %v843 = vld [vmem:[%s5 + $0x58] sm:$0xff]
    %v844 = vld [vmem:[%s5 + $0x60] sm:$0xff]
    %v845 = vld [vmem:[%s5 + $0x68] sm:$0xff]
    %v846 = vld [vmem:[%s5 + $0x70] sm:$0xff]
    %v847 = vld [vmem:[%s5 + $0x78] sm:$0xff]
    %849 = vset.pattern.permute.xlu0 0
    %850 = vperm.xlu0 %849, %v832
    %v851 = vpop.permute.xlu0 %850
    %854 = vset.pattern.permute.xlu0 0
    %855 = vperm.xlu0 %854, %v833
    %v856 = vpop.permute.xlu0 %855
    %859 = vset.pattern.permute.xlu0 0
    %860 = vperm.xlu0 %859, %v834
    %v861 = vpop.permute.xlu0 %860
    %864 = vset.pattern.permute.xlu0 0
    %865 = vperm.xlu0 %864, %v835
    %v866 = vpop.permute.xlu0 %865
    %869 = vset.pattern.permute.xlu0 0
    %870 = vperm.xlu0 %869, %v836
    %v871 = vpop.permute.xlu0 %870
    %874 = vset.pattern.permute.xlu0 0
    %875 = vperm.xlu0 %874, %v837
    %v876 = vpop.permute.xlu0 %875
    %879 = vset.pattern.permute.xlu0 0
    %880 = vperm.xlu0 %879, %v838
    %v881 = vpop.permute.xlu0 %880
    %884 = vset.pattern.permute.xlu0 0
    %885 = vperm.xlu0 %884, %v839
    %v886 = vpop.permute.xlu0 %885
    %889 = vset.pattern.permute.xlu0 0
    %890 = vperm.xlu0 %889, %v840
    %v891 = vpop.permute.xlu0 %890
    %894 = vset.pattern.permute.xlu0 0
    %895 = vperm.xlu0 %894, %v841
    %v896 = vpop.permute.xlu0 %895
    %899 = vset.pattern.permute.xlu0 0
    %900 = vperm.xlu0 %899, %v842
    %v901 = vpop.permute.xlu0 %900
    %904 = vset.pattern.permute.xlu0 0
    %905 = vperm.xlu0 %904, %v843
    %v906 = vpop.permute.xlu0 %905
    %909 = vset.pattern.permute.xlu0 0
    %910 = vperm.xlu0 %909, %v844
    %v911 = vpop.permute.xlu0 %910
    %914 = vset.pattern.permute.xlu0 0
    %915 = vperm.xlu0 %914, %v845
    %v916 = vpop.permute.xlu0 %915
    %919 = vset.pattern.permute.xlu0 0
    %920 = vperm.xlu0 %919, %v846
    %v921 = vpop.permute.xlu0 %920
    %924 = vset.pattern.permute.xlu0 0
    %925 = vperm.xlu0 %924, %v847
    %v926 = vpop.permute.xlu0 %925
    %v928 = vmul.f32 %v800, %v851
    %v929 = vmul.f32 %v801, %v851
    %v930 = vmul.f32 %v802, %v856
    %v931 = vmul.f32 %v803, %v856
    %v932 = vmul.f32 %v804, %v861
    %v933 = vmul.f32 %v805, %v861
    %v934 = vmul.f32 %v806, %v866
    %v935 = vmul.f32 %v807, %v866
    %v936 = vmul.f32 %v808, %v871
    %v937 = vmul.f32 %v809, %v871
    %v938 = vmul.f32 %v810, %v876
    %v939 = vmul.f32 %v811, %v876
    %v940 = vmul.f32 %v812, %v881
    %v941 = vmul.f32 %v813, %v881
    %v942 = vmul.f32 %v814, %v886
    %v943 = vmul.f32 %v815, %v886
    %v944 = vmul.f32 %v816, %v891
    %v945 = vmul.f32 %v817, %v891
    %v946 = vmul.f32 %v818, %v896
    %v947 = vmul.f32 %v819, %v896
    %v948 = vmul.f32 %v820, %v901
    %v949 = vmul.f32 %v821, %v901
    %v950 = vmul.f32 %v822, %v906
    %v951 = vmul.f32 %v823, %v906
    %v952 = vmul.f32 %v824, %v911
    %v953 = vmul.f32 %v825, %v911
    %v954 = vmul.f32 %v826, %v916
    %v955 = vmul.f32 %v827, %v916
    %v956 = vmul.f32 %v828, %v921
    %v957 = vmul.f32 %v829, %v921
    %v958 = vmul.f32 %v830, %v926
    %v959 = vmul.f32 %v831, %v926
    %v960 = vadd.f32 %v928, %v930
    %v961 = vadd.f32 %v960, %v932
    %v962 = vadd.f32 %v961, %v934
    %v963 = vadd.f32 %v962, %v936
    %v964 = vadd.f32 %v963, %v938
    %v965 = vadd.f32 %v964, %v940
    %v966 = vadd.f32 %v965, %v942
    %v967 = vadd.f32 %v966, %v944
    %v968 = vadd.f32 %v967, %v946
    %v969 = vadd.f32 %v968, %v948
    %v970 = vadd.f32 %v969, %v950
    %v971 = vadd.f32 %v970, %v952
    %v972 = vadd.f32 %v971, %v954
    %v973 = vadd.f32 %v972, %v956
    %v974 = vadd.f32 %v973, %v958
    %v975 = vrot.slane %v974, 4
    %v976 = vadd.f32 %v974, %v975
    %v977 = vrot.slane %v976, 2
    %v978 = vadd.f32 %v976, %v977
    %v979 = vrot.slane %v978, 1
    %v980 = vadd.f32 %v978, %v979
    %v981 = vadd.f32 %v929, %v931
    %v982 = vadd.f32 %v981, %v933
    %v983 = vadd.f32 %v982, %v935
    %v984 = vadd.f32 %v983, %v937
    %v985 = vadd.f32 %v984, %v939
    %v986 = vadd.f32 %v985, %v941
    %v987 = vadd.f32 %v986, %v943
    %v988 = vadd.f32 %v987, %v945
    %v989 = vadd.f32 %v988, %v947
    %v990 = vadd.f32 %v989, %v949
    %v991 = vadd.f32 %v990, %v951
    %v992 = vadd.f32 %v991, %v953
    %v993 = vadd.f32 %v992, %v955
    %v994 = vadd.f32 %v993, %v957
    %v995 = vadd.f32 %v994, %v959
    %v996 = vrot.slane %v995, 4
    %v997 = vadd.f32 %v995, %v996
    %v998 = vrot.slane %v997, 2
    %v999 = vadd.f32 %v997, %v998
    %v1000 = vrot.slane %v999, 1
    %v1001 = vadd.f32 %v999, %v1000
    %s1002 = sld [smem:[#allocation2]]
    %v1003 = vstv %s1002
    %v1004 = vadd.f32 %v980, %v1003
    %v1005 = vadd.f32 %v1001, %v1003
    %v1008 = vcombine.low %v1004, %v1005
    %v1010 = vunpack.c.l.s4 1966171168
    %v1011 = vunpack.c.0.s8 %v1010
    %v1012 = vlaneseq
    %v1013 = vshrl.u32 %v1012, 7
    %v1014 = vsub.s32 %v1011, %v1013
    %v1015 = vrot.slane %v1008, %v1014
    %v1017 = vunpack.c.l.s4 1966171168
    %v1018 = vunpack.c.0.s8 %v1017
    %v1019 = vlaneseq
    %v1020 = vshrl.u32 %v1019, 7
    %v1021 = vsub.s32 %v1018, %v1020
    %v1022 = vrot.slane %v1015, %v1021
    %v1024 = vlaneseq
    %vm1025 = vcmp.ge.s32.totalorder %v1024, 0
    %vm1026 = vcmp.lt.s32.totalorder %v1024, 256
    %vm1027 = vmand %vm1025, %vm1026
    %1028 = vst.msk [vmem:[#allocation3] sm:$0x3] %vm1027, %v1022
    // Predicated region
    $region30: #{tpu_custom_call.1} parent=1 // pred_check
      _
    $region31: #{tpu_custom_call.1} parent=1 // pred_check_branch
      %1030 = sbr.rel (0) target = $region33
    $region32: #{tpu_custom_call.1} parent=1 // pred_region
      %s1032 = ssub.s32 32, 32
      %1033 = vsyncadd [#allocation4], %s1032
      %s1035 = sshll.u32 [#allocation3], 4
      %s1036 = int_to_ptr.vmem [resolvable:$true] %s1035
      %1038 = dma.vmem_to_hbm [thread:$0]  %s1036, 32, %s7, [#allocation4]
    $region33: #{tpu_custom_call.1} parent=1 // pred_fallthru
      _
    // Predicated region
    $region34: #{tpu_custom_call.1} parent=1 // pred_check
      _
    $region35: #{tpu_custom_call.1} parent=1 // pred_check_branch
      %1040 = sbr.rel (0) target = $region37
    $region36: #{tpu_custom_call.1} parent=1 // pred_region
      %1041 = dma.done [#allocation4], 32
    $region37: #{tpu_custom_call.1} parent=1 // pred_fallthru
      _
    %1042 = vsyncpa [#allocation4], 1

</llo_original>
